<compile_context>
chip_gen: v6e
topology: v6e:2x2x1
jax: 0.10.0
libtpu: 0.0.40
codegen_flags: <defaults>
</compile_context>

<pallas_src>
import jax
import jax.numpy as jnp
from jax import lax
from jax.experimental import pallas as pl
from jax.experimental.pallas import tpu as pltpu


# --------------------------------- kernel ------------------------------------

def _convlstm_kernel(patch_ref, c_ref, w_ref, b_ref, peep_ref, ch_ref, cc_ref):
    """Per-batch-element fused ConvLSTM cell.

    patch_ref: [1, K*K*(Cin+Ch), H*W]   (bf16)  im2col'ed concat(x, h)
    c_ref:     [1, Ch, H*W]             (f32)   previous cell state
    w_ref:     [4*Ch, K*K*(Cin+Ch)]     (bf16)  fused gate weights
    b_ref:     [4*Ch, 1]                (f32)   fused gate bias
    peep_ref:  [3, Ch, H*W]             (f32)   Wci, Wcf, Wco
    ch_ref, cc_ref: [1, Ch, H*W]        (f32)   outputs
    """
    n_hidden = c_ref.shape[1]

    # One fused, lane-dense MXU matmul: [4*Ch, KC] @ [KC, H*W] -> f32 [4*Ch, H*W].
    z = jnp.dot(w_ref[...], patch_ref[0], preferred_element_type=jnp.float32)
    z = z + b_ref[...]                      # single bias broadcast over lanes

    c = c_ref[0]                            # [Ch, H*W] f32
    wci = peep_ref[0]
    wcf = peep_ref[1]
    wco = peep_ref[2]

    # Gates are sublane-aligned static slices (Ch is a multiple of 8): no relayout.
    zi = z[0 * n_hidden:1 * n_hidden, :]
    zf = z[1 * n_hidden:2 * n_hidden, :]
    zc = z[2 * n_hidden:3 * n_hidden, :]
    zo = z[3 * n_hidden:4 * n_hidden, :]

    # All gate math in f32 on lane-dense [Ch, H*W] tiles (256 lanes).
    ci = jax.nn.sigmoid(zi + c * wci)
    cf = jax.nn.sigmoid(zf + c * wcf)
    cc = cf * c + ci * jnp.tanh(zc)
    co = jax.nn.sigmoid(zo + cc * wco)
    ch = co * jnp.tanh(cc)

    ch_ref[0] = ch.astype(ch_ref.dtype)     # unmasked, lane-dense stores
    cc_ref[0] = cc.astype(cc_ref.dtype)


# --------------------------------- wrapper -----------------------------------

def convlstm_cell_pallas(x, h, c, wx, wh, bx, peep, ksize,
                         mxu_dtype=jnp.bfloat16):
    """x: [B,H,W,Cin], h,c: [B,H,W,Ch], wx: [4,k,k,Cin,Ch], wh: [4,k,k,Ch,Ch],
    bx: [4,Ch], peep: [3,H,W,Ch]. Returns (ch, cc) each [B,H,W,Ch] (f32)."""
    B, H, W, Cin = x.shape
    Ch = c.shape[-1]
    K = ksize
    # Symmetric padding only matches 'SAME' conv for odd kernel sizes (as in MSCRED).
    assert K % 2 == 1, "ConvLSTMCell kernel_size must be odd"
    p = (K - 1) // 2
    C = Cin + Ch
    KC = K * K * C
    HW = H * W

    # ---------------- plain-JAX layout glue (padding / im2col / packing) --------
    a = jnp.concatenate([x, h], axis=-1)                        # [B, H, W, Cin+Ch]
    ap = jnp.pad(a, ((0, 0), (p, p), (p, p), (0, 0)))           # [B, H+2p, W+2p, C]

    taps = [ap[:, ky:ky + H, kx:kx + W, :]
            for ky in range(K) for kx in range(K)]              # K*K x [B,H,W,C]
    patches_t = (jnp.stack(taps, axis=3)                        # [B, H, W, K*K, C]
                 .reshape(B, HW, KC)
                 .transpose(0, 2, 1)                            # [B, KC, HW]
                 .astype(mxu_dtype))

    # Fused weight: rows = (gate, out-channel), cols = (tap, [x-chan, h-chan]).
    wcat = jnp.concatenate([wx, wh], axis=3)                    # [4, K, K, C, Ch]
    w_t = (jnp.transpose(wcat, (0, 4, 1, 2, 3))                 # [4, Ch, K, K, C]
           .reshape(4 * Ch, KC)
           .astype(mxu_dtype))
    b_t = bx.reshape(4 * Ch, 1).astype(jnp.float32)

    # Channels-major state/peephole so gate math & stores are lane-dense (HW lanes).
    c_t = jnp.transpose(c, (0, 3, 1, 2)).reshape(B, Ch, HW).astype(jnp.float32)
    peep_t = jnp.transpose(peep, (0, 3, 1, 2)).reshape(3, Ch, HW).astype(jnp.float32)

    out_shape = (jax.ShapeDtypeStruct((B, Ch, HW), jnp.float32),
                 jax.ShapeDtypeStruct((B, Ch, HW), jnp.float32))

    ch_t, cc_t = pl.pallas_call(
        _convlstm_kernel,
        grid=(B,),
        in_specs=[
            pl.BlockSpec((1, KC, HW), lambda b: (b, 0, 0)),       # patches (per batch)
            pl.BlockSpec((1, Ch, HW), lambda b: (b, 0, 0)),       # cell state
            pl.BlockSpec((4 * Ch, KC), lambda b: (0, 0)),         # fused weights
            pl.BlockSpec((4 * Ch, 1), lambda b: (0, 0)),          # fused bias
            pl.BlockSpec((3, Ch, HW), lambda b: (0, 0, 0)),       # peephole params
        ],
        out_specs=(
            pl.BlockSpec((1, Ch, HW), lambda b: (b, 0, 0)),
            pl.BlockSpec((1, Ch, HW), lambda b: (b, 0, 0)),
        ),
        out_shape=out_shape,
        compiler_params=pltpu.CompilerParams(
            dimension_semantics=("parallel",),       # 2x on v7x megacore
            vmem_limit_bytes=32 << 20),              # headroom on v7x's 64 MiB VMEM
    )(patches_t, c_t, w_t, b_t, peep_t)

    # Back to NHWC (XLA glue).
    ch_new = jnp.transpose(ch_t.reshape(B, Ch, H, W), (0, 2, 3, 1))
    cc_new = jnp.transpose(cc_t.reshape(B, Ch, H, W), (0, 2, 3, 1))
    return ch_new, cc_new


# ----------------------------- pure-JAX reference ----------------------------

def _conv2d_same_ref(x, w, b=None):
    # x: NHWC, w: HWIO
    out = lax.conv_general_dilated(
        x, w, window_strides=(1, 1), padding='SAME',
        dimension_numbers=('NHWC', 'HWIO', 'NHWC'))
    if b is not None:
        out = out + b
    return out


def convlstm_cell_ref(x, h, c, wx, wh, bx, peep):
    zi = _conv2d_same_ref(x, wx[0], bx[0]) + _conv2d_same_ref(h, wh[0])
    zf = _conv2d_same_ref(x, wx[1], bx[1]) + _conv2d_same_ref(h, wh[1])
    zc = _conv2d_same_ref(x, wx[2], bx[2]) + _conv2d_same_ref(h, wh[2])
    zo = _conv2d_same_ref(x, wx[3], bx[3]) + _conv2d_same_ref(h, wh[3])
    ci = jax.nn.sigmoid(zi + c * peep[0])
    cf = jax.nn.sigmoid(zf + c * peep[1])
    cc = cf * c + ci * jnp.tanh(zc)
    co = jax.nn.sigmoid(zo + cc * peep[2])
    ch = co * jnp.tanh(cc)
    return ch, cc


# --------------------------------- main --------------------------------------

if __name__ == "__main__":
    B, Cin, Ch, H, W, K = 2, 4, 32, 16, 16, 3

    key = jax.random.PRNGKey(0)
    kx, kh, kc, kwx, kwh, kbx, kpeep = jax.random.split(key, 7)

    x = jax.random.normal(kx, (B, H, W, Cin), jnp.float32)
    h = jax.random.normal(kh, (B, H, W, Ch), jnp.float32)
    c = jax.random.normal(kc, (B, H, W, Ch), jnp.float32)

    # Deterministic synthetic parameters (shapes follow the nn.Module __init__).
    wx = 0.1 * jax.random.normal(kwx, (4, K, K, Cin, Ch), jnp.float32)   # Wxi,Wxf,Wxc,Wxo (HWIO)
    wh = 0.1 * jax.random.normal(kwh, (4, K, K, Ch, Ch), jnp.float32)    # Whi,Whf,Whc,Who (no bias)
    bx = 0.1 * jax.random.normal(kbx, (4, Ch), jnp.float32)              # biases of Wx* convs
    peep = 0.1 * jax.random.normal(kpeep, (3, H, W, Ch), jnp.float32)    # Wci, Wcf, Wco

    ch_out, cc_out = convlstm_cell_pallas(x, h, c, wx, wh, bx, peep, K)
    jax.block_until_ready((ch_out, cc_out))

    # The kernel feeds the MXU bf16 operands with f32 accumulation, so compare
    # against a reference using the identically-rounded operands (bias, cell
    # state and peephole params stay f32 in both paths).
    rd = lambda t: t.astype(jnp.bfloat16).astype(jnp.float32)
    ch_ref_v, cc_ref_v = convlstm_cell_ref(rd(x), rd(h), c, rd(wx), rd(wh), bx, peep)

    assert jnp.allclose(ch_out, ch_ref_v, rtol=1e-3, atol=1e-3), "ch mismatch"
    assert jnp.allclose(cc_out, cc_ref_v, rtol=1e-3, atol=1e-3), "cc mismatch"

    print("KERNEL_OK")
</pallas_src>

<mosaic_0001>
module attributes {stable_mosaic.version = 11 : i64} {
  func.func @_convlstm_kernel(%arg0: i32, %arg1: memref<1x324x256xbf16, #tpu.memory_space<vmem>>, %arg2: memref<1x32x256xf32, #tpu.memory_space<vmem>>, %arg3: memref<128x324xbf16, #tpu.memory_space<vmem>>, %arg4: memref<128x1xf32, #tpu.memory_space<vmem>>, %arg5: memref<3x32x256xf32, #tpu.memory_space<vmem>>, %arg6: memref<1x32x256xf32, #tpu.memory_space<vmem>>, %arg7: memref<1x32x256xf32, #tpu.memory_space<vmem>>) attributes {dimension_semantics = [#tpu.dimension_semantics<parallel>], iteration_bounds = array<i64: 2>, scalar_prefetch = 0 : i64, scratch_operands = 0 : i64, tpu.core_type = #tpu.core_type<tc>, window_params = [{transform_indices = @transform_0, window_bounds = array<i64: 1, 324, 256>}, {transform_indices = @transform_1, window_bounds = array<i64: 1, 32, 256>}, {pipeline_mode = #tpu.pipeline_mode<synchronous>, transform_indices = @transform_2, window_bounds = array<i64: 128, 324>}, {pipeline_mode = #tpu.pipeline_mode<synchronous>, transform_indices = @transform_3, window_bounds = array<i64: 128, 1>}, {pipeline_mode = #tpu.pipeline_mode<synchronous>, transform_indices = @transform_4, window_bounds = array<i64: 3, 32, 256>}, {transform_indices = @transform_5, window_bounds = array<i64: 1, 32, 256>}, {transform_indices = @transform_6, window_bounds = array<i64: 1, 32, 256>}]} {
    %c0 = arith.constant 0 : index
    %c0_0 = arith.constant 0 : index
    %0 = vector.load %arg3[%c0, %c0_0] : memref<128x324xbf16, #tpu.memory_space<vmem>>, vector<128x324xbf16>
    %c0_1 = arith.constant 0 : index
    %c0_2 = arith.constant 0 : index
    %c0_3 = arith.constant 0 : index
    %1 = vector.load %arg1[%c0_1, %c0_2, %c0_3] : memref<1x324x256xbf16, #tpu.memory_space<vmem>>, vector<1x324x256xbf16>
    %2 = vector.shape_cast %1 : vector<1x324x256xbf16> to vector<324x256xbf16>
    %cst = arith.constant dense<0.000000e+00> : vector<128x256xf32>
    %3 = tpu.matmul %0, %2, %cst {dimension_numbers = #tpu.dot_dimension_numbers<[1], [0], [0], [1], [0, 0, 1, 1], [], []>} : vector<128x324xbf16>, vector<324x256xbf16>, vector<128x256xf32> -> vector<128x256xf32>
    %c0_4 = arith.constant 0 : index
    %c0_5 = arith.constant 0 : index
    %4 = vector.load %arg4[%c0_4, %c0_5] : memref<128x1xf32, #tpu.memory_space<vmem>>, vector<128x1xf32>
    %5 = vector.broadcast %4 : vector<128x1xf32> to vector<128x256xf32>
    %6 = arith.addf %3, %5 : vector<128x256xf32>
    %c0_6 = arith.constant 0 : index
    %c0_7 = arith.constant 0 : index
    %c0_8 = arith.constant 0 : index
    %7 = vector.load %arg2[%c0_6, %c0_7, %c0_8] : memref<1x32x256xf32, #tpu.memory_space<vmem>>, vector<1x32x256xf32>
    %8 = vector.shape_cast %7 : vector<1x32x256xf32> to vector<32x256xf32>
    %c0_9 = arith.constant 0 : index
    %c0_10 = arith.constant 0 : index
    %c0_11 = arith.constant 0 : index
    %9 = vector.load %arg5[%c0_9, %c0_10, %c0_11] : memref<3x32x256xf32, #tpu.memory_space<vmem>>, vector<1x32x256xf32>
    %10 = vector.shape_cast %9 : vector<1x32x256xf32> to vector<32x256xf32>
    %c1 = arith.constant 1 : index
    %c0_12 = arith.constant 0 : index
    %c0_13 = arith.constant 0 : index
    %11 = vector.load %arg5[%c1, %c0_12, %c0_13] : memref<3x32x256xf32, #tpu.memory_space<vmem>>, vector<1x32x256xf32>
    %12 = vector.shape_cast %11 : vector<1x32x256xf32> to vector<32x256xf32>
    %c2 = arith.constant 2 : index
    %c0_14 = arith.constant 0 : index
    %c0_15 = arith.constant 0 : index
    %13 = vector.load %arg5[%c2, %c0_14, %c0_15] : memref<3x32x256xf32, #tpu.memory_space<vmem>>, vector<1x32x256xf32>
    %14 = vector.shape_cast %13 : vector<1x32x256xf32> to vector<32x256xf32>
    %15 = vector.extract_strided_slice %6 {offsets = [0, 0], sizes = [32, 256], strides = [1, 1]} : vector<128x256xf32> to vector<32x256xf32>
    %16 = vector.extract_strided_slice %6 {offsets = [32, 0], sizes = [32, 256], strides = [1, 1]} : vector<128x256xf32> to vector<32x256xf32>
    %17 = vector.extract_strided_slice %6 {offsets = [64, 0], sizes = [32, 256], strides = [1, 1]} : vector<128x256xf32> to vector<32x256xf32>
    %18 = vector.extract_strided_slice %6 {offsets = [96, 0], sizes = [32, 256], strides = [1, 1]} : vector<128x256xf32> to vector<32x256xf32>
    %19 = arith.mulf %8, %10 : vector<32x256xf32>
    %20 = arith.addf %15, %19 : vector<32x256xf32>
    %21 = arith.negf %20 : vector<32x256xf32>
    %22 = math.exp %21 : vector<32x256xf32>
    %cst_16 = arith.constant 1.000000e+00 : f32
    %23 = vector.broadcast %cst_16 : f32 to vector<32x256xf32>
    %24 = arith.addf %23, %22 : vector<32x256xf32>
    %25 = arith.divf %23, %24 : vector<32x256xf32>
    %26 = arith.mulf %8, %12 : vector<32x256xf32>
    %27 = arith.addf %16, %26 : vector<32x256xf32>
    %28 = arith.negf %27 : vector<32x256xf32>
    %29 = math.exp %28 : vector<32x256xf32>
    %cst_17 = arith.constant 1.000000e+00 : f32
    %30 = vector.broadcast %cst_17 : f32 to vector<32x256xf32>
    %31 = arith.addf %30, %29 : vector<32x256xf32>
    %32 = arith.divf %30, %31 : vector<32x256xf32>
    %33 = arith.mulf %32, %8 : vector<32x256xf32>
    %34 = math.tanh %17 : vector<32x256xf32>
    %35 = arith.mulf %25, %34 : vector<32x256xf32>
    %36 = arith.addf %33, %35 : vector<32x256xf32>
    %37 = arith.mulf %36, %14 : vector<32x256xf32>
    %38 = arith.addf %18, %37 : vector<32x256xf32>
    %39 = arith.negf %38 : vector<32x256xf32>
    %40 = math.exp %39 : vector<32x256xf32>
    %cst_18 = arith.constant 1.000000e+00 : f32
    %41 = vector.broadcast %cst_18 : f32 to vector<32x256xf32>
    %42 = arith.addf %41, %40 : vector<32x256xf32>
    %43 = arith.divf %41, %42 : vector<32x256xf32>
    %44 = math.tanh %36 : vector<32x256xf32>
    %45 = arith.mulf %43, %44 : vector<32x256xf32>
    %c0_19 = arith.constant 0 : index
    %c0_20 = arith.constant 0 : index
    %c0_21 = arith.constant 0 : index
    %46 = vector.load %arg6[%c0_19, %c0_20, %c0_21] : memref<1x32x256xf32, #tpu.memory_space<vmem>>, vector<1x32x256xf32>
    %47 = vector.shape_cast %46 : vector<1x32x256xf32> to vector<32x256xf32>
    %48 = vector.shape_cast %45 : vector<32x256xf32> to vector<1x32x256xf32>
    tpu.vector_store %arg6[%c0_19, %c0_20, %c0_21], %48 {strides = array<i32>} : memref<1x32x256xf32, #tpu.memory_space<vmem>>, vector<1x32x256xf32>,
    %c0_22 = arith.constant 0 : index
    %c0_23 = arith.constant 0 : index
    %c0_24 = arith.constant 0 : index
    %49 = vector.load %arg7[%c0_22, %c0_23, %c0_24] : memref<1x32x256xf32, #tpu.memory_space<vmem>>, vector<1x32x256xf32>
    %50 = vector.shape_cast %49 : vector<1x32x256xf32> to vector<32x256xf32>
    %51 = vector.shape_cast %36 : vector<32x256xf32> to vector<1x32x256xf32>
    tpu.vector_store %arg7[%c0_22, %c0_23, %c0_24], %51 {strides = array<i32>} : memref<1x32x256xf32, #tpu.memory_space<vmem>>, vector<1x32x256xf32>,
    return
  }
  func.func @transform_0(%arg0: i32) -> (i32, i32, i32) {
    %c0_i32 = arith.constant 0 : i32
    %c0_i32_0 = arith.constant 0 : i32
    %c0_i32_1 = arith.constant 0 : i32
    return %arg0, %c0_i32, %c0_i32_0 : i32, i32, i32
  }
  func.func @transform_1(%arg0: i32) -> (i32, i32, i32) {
    %c0_i32 = arith.constant 0 : i32
    %c0_i32_0 = arith.constant 0 : i32
    %c0_i32_1 = arith.constant 0 : i32
    return %arg0, %c0_i32, %c0_i32_0 : i32, i32, i32
  }
  func.func @transform_2(%arg0: i32) -> (i32, i32) {
    %c0_i32 = arith.constant 0 : i32
    %c0_i32_0 = arith.constant 0 : i32
    %c0_i32_1 = arith.constant 0 : i32
    return %c0_i32, %c0_i32_0 : i32, i32
  }
  func.func @transform_3(%arg0: i32) -> (i32, i32) {
    %c0_i32 = arith.constant 0 : i32
    %c0_i32_0 = arith.constant 0 : i32
    %c0_i32_1 = arith.constant 0 : i32
    return %c0_i32, %c0_i32_0 : i32, i32
  }
  func.func @transform_4(%arg0: i32) -> (i32, i32, i32) {
    %c0_i32 = arith.constant 0 : i32
    %c0_i32_0 = arith.constant 0 : i32
    %c0_i32_1 = arith.constant 0 : i32
    %c0_i32_2 = arith.constant 0 : i32
    return %c0_i32, %c0_i32_0, %c0_i32_1 : i32, i32, i32
  }
  func.func @transform_5(%arg0: i32) -> (i32, i32, i32) {
    %c0_i32 = arith.constant 0 : i32
    %c0_i32_0 = arith.constant 0 : i32
    %c0_i32_1 = arith.constant 0 : i32
    return %arg0, %c0_i32, %c0_i32_0 : i32, i32, i32
  }
  func.func @transform_6(%arg0: i32) -> (i32, i32, i32) {
    %c0_i32 = arith.constant 0 : i32
    %c0_i32_0 = arith.constant 0 : i32
    %c0_i32_1 = arith.constant 0 : i32
    return %arg0, %c0_i32, %c0_i32_0 : i32, i32, i32
  }
}

</mosaic_0001>

<llo_original>
// kernel: tpu_custom_call.1
$region0: #{tpu_custom_call.1}
  #allocation0 [shape = 'u32[]', space=smem, size = 0x4, offset = 0x4, fixed_abs, tag = 'smem constant byte address 0x4 - core index']
  #allocation1 [shape = 'u32[144,128]{1,0:T(1,128)}', space=vmem, size = 0x12000, scoped, tag = 'internal scratch']
  %s0 = inlined_call_operand.vmem [shape: bf16[2,324,256], index: 0, kind: input, shape index: {}]
  %s1 = inlined_call_operand.vmem [shape: f32[2,32,256], index: 1, kind: input, shape index: {}]
  %s2 = inlined_call_operand.vmem [shape: bf16[128,324], index: 2, kind: input, shape index: {}]
  %s3 = inlined_call_operand.vmem [shape: f32[128,1], index: 3, kind: input, shape index: {}]
  %s4 = inlined_call_operand.vmem [shape: f32[3,32,256], index: 4, kind: input, shape index: {}]
  %s5 = inlined_call_operand.hbm [shape: f32[2,32,256], index: 5, kind: output, shape index: {0}]
  %s6 = inlined_call_operand.hbm [shape: f32[2,32,256], index: 6, kind: output, shape index: {1}]
  %7 = xla_tuple %s5, %s6
  %s8 = sld [smem:[#allocation0]]
  $region61: #{tpu_custom_call.1} parent=0
    _
  %s10 = ssub.s32 1, %s8
  %s11 = scalar_select 0, %s10, %s8
  $region1: #{tpu_custom_call.1} parent=0
    #allocation2 [shape = 'u8[65536]{0}', space=vmem, size = 0x10000, scoped, tag = 'output window, operand 0']
    #allocation3 [shape = 's32[2]{0}', space=sflag, size = 0x8, scoped, tag = 'scoped memory for tpu_custom_call.1']
    #allocation4 [shape = 'u8[65536]{0}', space=vmem, size = 0x10000, scoped, tag = 'output window, operand 1']
    #allocation5 [shape = 's32[2]{0}', space=sflag, size = 0x8, scoped, tag = 'scoped memory for tpu_custom_call.1']
    %12 = vsyncpa [#allocation3], 0
    %s13 = scalar_lea.sflag [#allocation3], 1
    %14 = vsyncpa %s13, 0
    %15 = vsyncpa [#allocation5], 0
    %s16 = scalar_lea.sflag [#allocation5], 1
    %17 = vsyncpa %s16, 0
    loop: start=0, step=1, limit=4
    $region2: #{tpu_custom_call.1} parent=1 // loop_pre_header
      _
    $region3: #{tpu_custom_call.1} parent=1 // loop_header
      %s19 = sphi 0, %s23
      %p20 = scmp.ge.s32.totalorder %s19, 4
      %s29 = sphi 0, %s31
      %s32 = sphi 0, %s29
      %s33 = sphi 0, %s32
      %s49 = sphi 0, %s33
      %s55 = sphi 0, %s57
      %s58 = sphi 0, %s55
      %s59 = sphi 0, %s58
      %s75 = sphi 0, %s59
      %s79 = sphi 0, %s79
      %s81 = sphi 0, %s79
      %s82 = sphi 0, %s81
      %s96 = sphi 0, %s82
      %s100 = sphi 0, %s100
      %s102 = sphi 0, %s100
      %s103 = sphi 0, %s102
      %s117 = sphi 0, %s103
      %s121 = sphi 0, %s121
      %s123 = sphi 0, %s121
      %s124 = sphi 0, %s123
      %s138 = sphi 0, %s124
      %s144 = sphi 0, %s146
      %s147 = sphi 0, %s144
      %s148 = sphi 0, %s147
      %s164 = sphi 0, %s148
      %s170 = sphi 0, %s172
      %s173 = sphi 0, %s170
      %s174 = sphi 0, %s173
      %s190 = sphi 0, %s174
    $region4: #{tpu_custom_call.1} parent=1 // loop_header_branch
      %22 = sbr.rel (%p20) target = $region8
    $region5: #{tpu_custom_call.1} parent=1 // loop_body
      %s24 = ssub.s32 %s19, 1
      %s25 = ssub.s32 %s19, 2
      %s26 = sadd.s32 %s19, 1
      %s27 = ssub.s32 %s19, %s26
      %p28 = scmp.eq.s32.totalorder %s27, 0
      %s30 = sadd.s32 %s29, 1
      %s31 = scalar_select %p28, %s29, %s30
      %p34 = pneg %p28
      %p35 = scmp.eq.s32.totalorder %s19, 1
      %p36 = por %p34, %p35
      %p37 = scmp.ne.s32.totalorder %s29, %s32
      %p38 = scmp.eq.s32.totalorder %s19, 0
      %p39 = por %p37, %p38
      %p40 = scmp.ne.s32.totalorder %s29, %s32
      %p41 = scmp.eq.s32.totalorder %s24, 1
      %p42 = por %p40, %p41
      %p43 = scmp.ne.s32.totalorder %s32, %s33
      %p44 = scmp.eq.s32.totalorder %s24, 0
      %p45 = por %p43, %p44
      %p46 = scmp.ne.s32.totalorder %s32, %s33
      %p47 = scmp.eq.s32.totalorder %s25, 1
      %p48 = por %p46, %p47
      %p50 = scmp.ne.s32.totalorder %s33, %s49
      %p51 = scmp.eq.s32.totalorder %s25, 0
      %p52 = por %p50, %p51
      %s53 = ssub.s32 %s19, %s26
      %p54 = scmp.eq.s32.totalorder %s53, 0
      %s56 = sadd.s32 %s55, 1
      %s57 = scalar_select %p54, %s55, %s56
      %p60 = pneg %p54
      %p61 = scmp.eq.s32.totalorder %s19, 1
      %p62 = por %p60, %p61
      %p63 = scmp.ne.s32.totalorder %s55, %s58
      %p64 = scmp.eq.s32.totalorder %s19, 0
      %p65 = por %p63, %p64
      %p66 = scmp.ne.s32.totalorder %s55, %s58
      %p67 = scmp.eq.s32.totalorder %s24, 1
      %p68 = por %p66, %p67
      %p69 = scmp.ne.s32.totalorder %s58, %s59
      %p70 = scmp.eq.s32.totalorder %s24, 0
      %p71 = por %p69, %p70
      %p72 = scmp.ne.s32.totalorder %s58, %s59
      %p73 = scmp.eq.s32.totalorder %s25, 1
      %p74 = por %p72, %p73
      %p76 = scmp.ne.s32.totalorder %s59, %s75
      %p77 = scmp.eq.s32.totalorder %s25, 0
      %p78 = por %p76, %p77
      %s80 = sadd.s32 %s79, 1
      %p83 = scmp.eq.s32.totalorder %s19, 1
      %p84 = scmp.ne.s32.totalorder %s79, %s81
      %p85 = scmp.eq.s32.totalorder %s19, 0
      %p86 = por %p84, %p85
      %p87 = scmp.ne.s32.totalorder %s79, %s81
      %p88 = scmp.eq.s32.totalorder %s24, 1
      %p89 = por %p87, %p88
      %p90 = scmp.ne.s32.totalorder %s81, %s82
      %p91 = scmp.eq.s32.totalorder %s24, 0
      %p92 = por %p90, %p91
      %p93 = scmp.ne.s32.totalorder %s81, %s82
      %p94 = scmp.eq.s32.totalorder %s25, 1
      %p95 = por %p93, %p94
      %p97 = scmp.ne.s32.totalorder %s82, %s96
      %p98 = scmp.eq.s32.totalorder %s25, 0
      %p99 = por %p97, %p98
      %s101 = sadd.s32 %s100, 1
      %p104 = scmp.eq.s32.totalorder %s19, 1
      %p105 = scmp.ne.s32.totalorder %s100, %s102
      %p106 = scmp.eq.s32.totalorder %s19, 0
      %p107 = por %p105, %p106
      %p108 = scmp.ne.s32.totalorder %s100, %s102
      %p109 = scmp.eq.s32.totalorder %s24, 1
      %p110 = por %p108, %p109
      %p111 = scmp.ne.s32.totalorder %s102, %s103
      %p112 = scmp.eq.s32.totalorder %s24, 0
      %p113 = por %p111, %p112
      %p114 = scmp.ne.s32.totalorder %s102, %s103
      %p115 = scmp.eq.s32.totalorder %s25, 1
      %p116 = por %p114, %p115
      %p118 = scmp.ne.s32.totalorder %s103, %s117
      %p119 = scmp.eq.s32.totalorder %s25, 0
      %p120 = por %p118, %p119
      %s122 = sadd.s32 %s121, 1
      %p125 = scmp.eq.s32.totalorder %s19, 1
      %p126 = scmp.ne.s32.totalorder %s121, %s123
      %p127 = scmp.eq.s32.totalorder %s19, 0
      %p128 = por %p126, %p127
      %p129 = scmp.ne.s32.totalorder %s121, %s123
      %p130 = scmp.eq.s32.totalorder %s24, 1
      %p131 = por %p129, %p130
      %p132 = scmp.ne.s32.totalorder %s123, %s124
      %p133 = scmp.eq.s32.totalorder %s24, 0
      %p134 = por %p132, %p133
      %p135 = scmp.ne.s32.totalorder %s123, %s124
      %p136 = scmp.eq.s32.totalorder %s25, 1
      %p137 = por %p135, %p136
      %p139 = scmp.ne.s32.totalorder %s124, %s138
      %p140 = scmp.eq.s32.totalorder %s25, 0
      %p141 = por %p139, %p140
      %s142 = ssub.s32 %s19, %s26
      %p143 = scmp.eq.s32.totalorder %s142, 0
      %s145 = sadd.s32 %s144, 1
      %s146 = scalar_select %p143, %s144, %s145
      %p149 = pneg %p143
      %p150 = scmp.eq.s32.totalorder %s19, 1
      %p151 = por %p149, %p150
      %p152 = scmp.ne.s32.totalorder %s144, %s147
      %p153 = scmp.eq.s32.totalorder %s19, 0
      %p154 = por %p152, %p153
      %p155 = scmp.ne.s32.totalorder %s144, %s147
      %p156 = scmp.eq.s32.totalorder %s24, 1
      %p157 = por %p155, %p156
      %p158 = scmp.ne.s32.totalorder %s147, %s148
      %p159 = scmp.eq.s32.totalorder %s24, 0
      %p160 = por %p158, %p159
      %p161 = scmp.ne.s32.totalorder %s147, %s148
      %p162 = scmp.eq.s32.totalorder %s25, 1
      %p163 = por %p161, %p162
      %p165 = scmp.ne.s32.totalorder %s148, %s164
      %p166 = scmp.eq.s32.totalorder %s25, 0
      %p167 = por %p165, %p166
      %s168 = ssub.s32 %s19, %s26
      %p169 = scmp.eq.s32.totalorder %s168, 0
      %s171 = sadd.s32 %s170, 1
      %s172 = scalar_select %p169, %s170, %s171
      %p175 = pneg %p169
      %p176 = scmp.eq.s32.totalorder %s19, 1
      %p177 = por %p175, %p176
      %p178 = scmp.ne.s32.totalorder %s170, %s173
      %p179 = scmp.eq.s32.totalorder %s19, 0
      %p180 = por %p178, %p179
      %p181 = scmp.ne.s32.totalorder %s170, %s173
      %p182 = scmp.eq.s32.totalorder %s24, 1
      %p183 = por %p181, %p182
      %p184 = scmp.ne.s32.totalorder %s173, %s174
      %p185 = scmp.eq.s32.totalorder %s24, 0
      %p186 = por %p184, %p185
      %p187 = scmp.ne.s32.totalorder %s173, %s174
      %p188 = scmp.eq.s32.totalorder %s25, 1
      %p189 = por %p187, %p188
      %p191 = scmp.ne.s32.totalorder %s174, %s190
      %p192 = scmp.eq.s32.totalorder %s25, 0
      %p193 = por %p191, %p192
      %p194 = scmp.le.s32.totalorder 1, %s19
      %p195 = scmp.lt.s32.totalorder %s19, 3
      %p196 = pnand %p194, %p195
      %p197 = pneg %p196
      // Predicated region
      $region9: #{tpu_custom_call.1} parent=5 // pred_check
        _
      $region10: #{tpu_custom_call.1} parent=5 // pred_check_branch
        %199 = sbr.rel (%p196) target = $region12
      $region11: #{tpu_custom_call.1} parent=5 // pred_region
        %s200 = ssub.s32 %s19, 1
        // Predicated region
        $region13: #{tpu_custom_call.1} parent=11 // pred_check
          %p201 = pneg %p92
        $region14: #{tpu_custom_call.1} parent=11 // pred_check_branch
          %203 = sbr.rel (%p201) target = $region16
        $region15: #{tpu_custom_call.1} parent=11 // pred_region
          _
        $region16: #{tpu_custom_call.1} parent=11 // pred_fallthru
          _
        // Predicated region
        $region17: #{tpu_custom_call.1} parent=11 // pred_check
          %p204 = pneg %p113
        $region18: #{tpu_custom_call.1} parent=11 // pred_check_branch
          %206 = sbr.rel (%p204) target = $region20
        $region19: #{tpu_custom_call.1} parent=11 // pred_region
          _
        $region20: #{tpu_custom_call.1} parent=11 // pred_fallthru
          _
        // Predicated region
        $region21: #{tpu_custom_call.1} parent=11 // pred_check
          %p207 = pneg %p134
        $region22: #{tpu_custom_call.1} parent=11 // pred_check_branch
          %209 = sbr.rel (%p207) target = $region24
        $region23: #{tpu_custom_call.1} parent=11 // pred_region
          _
        $region24: #{tpu_custom_call.1} parent=11 // pred_fallthru
          _
      $region12: #{tpu_custom_call.1} parent=5 // pred_fallthru
        _
      %p210 = scmp.lt.s32.totalorder %s19, 2
      // Predicated region
      $region25: #{tpu_custom_call.1} parent=5 // pred_check
        %p211 = pneg %p210
      $region26: #{tpu_custom_call.1} parent=5 // pred_check_branch
        %213 = sbr.rel (%p211) target = $region28
      $region27: #{tpu_custom_call.1} parent=5 // pred_region
        // Predicated region
        $region29: #{tpu_custom_call.1} parent=27 // pred_check
          %p214 = pneg %p39
        $region30: #{tpu_custom_call.1} parent=27 // pred_check_branch
          %216 = sbr.rel (%p214) target = $region32
        $region31: #{tpu_custom_call.1} parent=27 // pred_region
          %p217 = scmp.lt.s32.totalorder %s19, 1
          %s218 = scalar_select %p217, %s19, 1
          %s219 = smul.addr %s218, 82
          %s220 = smul.addr %s219, 4
          %s221 = scalar_lea.vmem %s0, %s220
        $region32: #{tpu_custom_call.1} parent=27 // pred_fallthru
          _
        // Predicated region
        $region33: #{tpu_custom_call.1} parent=27 // pred_check
          %p222 = pneg %p65
        $region34: #{tpu_custom_call.1} parent=27 // pred_check_branch
          %224 = sbr.rel (%p222) target = $region36
        $region35: #{tpu_custom_call.1} parent=27 // pred_region
          %p225 = scmp.lt.s32.totalorder %s19, 1
          %s226 = scalar_select %p225, %s19, 1
          %s227 = smul.addr %s226, 8
          %s228 = smul.addr %s227, 8
          %s229 = scalar_lea.vmem %s1, %s228
        $region36: #{tpu_custom_call.1} parent=27 // pred_fallthru
          _
      $region28: #{tpu_custom_call.1} parent=5 // pred_fallthru
        _
      %p230 = scmp.le.s32.totalorder 1, %s19
      %p231 = scmp.lt.s32.totalorder %s19, 3
      %p232 = pnand %p230, %p231
      %p233 = pneg %p232
      // Predicated region
      $region37: #{tpu_custom_call.1} parent=5 // pred_check
        _
      $region38: #{tpu_custom_call.1} parent=5 // pred_check_branch
        %235 = sbr.rel (%p232) target = $region40
      $region39: #{tpu_custom_call.1} parent=5 // pred_region
        %s236 = ssub.s32 %s19, 1
        %p237 = scmp.lt.s32.totalorder %s24, 1
        %s238 = scalar_select %p237, %s24, 1
        %s239 = smul.addr %s238, 82
        %s240 = smul.addr %s239, 4
        %s241 = scalar_lea.vmem %s0, %s240
        %p242 = pneg %p45
        %p243 = pneg %p42
        %p244 = scmp.lt.s32.totalorder %s24, 1
        %s245 = scalar_select %p244, %s24, 1
        %s246 = smul.addr %s245, 8
        %s247 = smul.addr %s246, 8
        %s248 = scalar_lea.vmem %s1, %s247
        %p249 = pneg %p71
        %p250 = pneg %p68
        %p251 = pneg %p92
        %p252 = pneg %p89
        %p253 = pneg %p113
        %p254 = pneg %p110
        %p255 = pneg %p134
        %p256 = pneg %p131
        %p257 = pneg %p160
        %p258 = pneg %p157
        %s259 = sand.u32 %s147, 1
        %s260 = scalar_lea.sflag [#allocation3], %s259
        %s261 = sand.u32 %s147, 1
        %s262 = smul.addr %s261, 64
        %s263 = scalar_lea.vmem [#allocation2], %s262
        %p264 = pneg %p186
        %p265 = pneg %p183
        %s266 = sand.u32 %s173, 1
        %s267 = scalar_lea.sflag [#allocation5], %s266
        %s268 = sand.u32 %s173, 1
        %s269 = smul.addr %s268, 64
        %s270 = scalar_lea.vmem [#allocation4], %s269
        %p271 = scmp.lt.s32.totalorder %s24, 1
        %s272 = scalar_select %p271, %s24, 1
        %s273 = smul.addr %s272, 82
        %s274 = smul.addr %s273, 4
        %s275 = scalar_lea.vmem %s0, %s274
        %p276 = scmp.lt.s32.totalorder %s24, 1
        %s277 = scalar_select %p276, %s24, 1
        %s278 = smul.addr %s277, 8
        %s279 = smul.addr %s278, 8
        %s280 = scalar_lea.vmem %s1, %s279
        %v282 = vld [vmem:[%s2] sm:$0xff]
        %v283 = vld [vmem:[%s2 + $0x8] sm:$0xf]
        %v284 = vld [vmem:[%s2 + $0xc] sm:$0xff]
        %v285 = vld [vmem:[%s2 + $0x14] sm:$0xf]
        %v286 = vld [vmem:[%s2 + $0x18] sm:$0xff]
        %v287 = vld [vmem:[%s2 + $0x20] sm:$0xf]
        %v288 = vld [vmem:[%s2 + $0x24] sm:$0xff]
        %v289 = vld [vmem:[%s2 + $0x2c] sm:$0xf]
        %v290 = vld [vmem:[%s2 + $0x30] sm:$0xff]
        %v291 = vld [vmem:[%s2 + $0x38] sm:$0xf]
        %v292 = vld [vmem:[%s2 + $0x3c] sm:$0xff]
        %v293 = vld [vmem:[%s2 + $0x44] sm:$0xf]
        %v294 = vld [vmem:[%s2 + $0x48] sm:$0xff]
        %v295 = vld [vmem:[%s2 + $0x50] sm:$0xf]
        %v296 = vld [vmem:[%s2 + $0x54] sm:$0xff]
        %v297 = vld [vmem:[%s2 + $0x5c] sm:$0xf]
        %v298 = vld [vmem:[%s2 + $0x60] sm:$0xff]
        %v299 = vld [vmem:[%s2 + $0x68] sm:$0xf]
        %v300 = vld [vmem:[%s2 + $0x6c] sm:$0xff]
        %v301 = vld [vmem:[%s2 + $0x74] sm:$0xf]
        %v302 = vld [vmem:[%s2 + $0x78] sm:$0xff]
        %v303 = vld [vmem:[%s2 + $0x80] sm:$0xf]
        %v304 = vld [vmem:[%s2 + $0x84] sm:$0xff]
        %v305 = vld [vmem:[%s2 + $0x8c] sm:$0xf]
        %v306 = vld [vmem:[%s2 + $0x90] sm:$0xff]
        %v307 = vld [vmem:[%s2 + $0x98] sm:$0xf]
        %v308 = vld [vmem:[%s2 + $0x9c] sm:$0xff]
        %v309 = vld [vmem:[%s2 + $0xa4] sm:$0xf]
        %v310 = vld [vmem:[%s2 + $0xa8] sm:$0xff]
        %v311 = vld [vmem:[%s2 + $0xb0] sm:$0xf]
        %v312 = vld [vmem:[%s2 + $0xb4] sm:$0xff]
        %v313 = vld [vmem:[%s2 + $0xbc] sm:$0xf]
        %v314 = vld [vmem:[%s275] sm:$0xff]
        %v315 = vld [vmem:[%s275 + $0x8] sm:$0xff]
        %v316 = vld [vmem:[%s275 + $0x10] sm:$0xff]
        %v317 = vld [vmem:[%s275 + $0x18] sm:$0xff]
        %v318 = vld [vmem:[%s275 + $0x20] sm:$0xff]
        %v319 = vld [vmem:[%s275 + $0x28] sm:$0xff]
        %v320 = vld [vmem:[%s275 + $0x30] sm:$0xff]
        %v321 = vld [vmem:[%s275 + $0x38] sm:$0xff]
        %v322 = vld [vmem:[%s275 + $0x40] sm:$0xff]
        %v323 = vld [vmem:[%s275 + $0x48] sm:$0xff]
        %v324 = vld [vmem:[%s275 + $0x50] sm:$0xff]
        %v325 = vld [vmem:[%s275 + $0x58] sm:$0xff]
        %v326 = vld [vmem:[%s275 + $0x60] sm:$0xff]
        %v327 = vld [vmem:[%s275 + $0x68] sm:$0xff]
        %v328 = vld [vmem:[%s275 + $0x70] sm:$0xff]
        %v329 = vld [vmem:[%s275 + $0x78] sm:$0xff]
        %v330 = vld [vmem:[%s275 + $0x80] sm:$0xff]
        %v331 = vld [vmem:[%s275 + $0x88] sm:$0xff]
        %v332 = vld [vmem:[%s275 + $0x90] sm:$0xff]
        %v333 = vld [vmem:[%s275 + $0x98] sm:$0xff]
        %v334 = vld [vmem:[%s275 + $0xa0] sm:$0xff]
        %v335 = vld [vmem:[%s275 + $0xa8] sm:$0xff]
        %v336 = vld [vmem:[%s275 + $0xb0] sm:$0xff]
        %v337 = vld [vmem:[%s275 + $0xb8] sm:$0xff]
        %v338 = vld [vmem:[%s275 + $0xc0] sm:$0xff]
        %v339 = vld [vmem:[%s275 + $0xc8] sm:$0xff]
        %v340 = vld [vmem:[%s275 + $0xd0] sm:$0xff]
        %v341 = vld [vmem:[%s275 + $0xd8] sm:$0xff]
        %v342 = vld [vmem:[%s275 + $0xe0] sm:$0xff]
        %v343 = vld [vmem:[%s275 + $0xe8] sm:$0xff]
        %v344 = vld [vmem:[%s275 + $0xf0] sm:$0xff]
        %v345 = vld [vmem:[%s275 + $0xf8] sm:$0xff]
        %v346 = vld [vmem:[%s275 + $0x100] sm:$0xff]
        %v347 = vld [vmem:[%s275 + $0x108] sm:$0xff]
        %v348 = vld [vmem:[%s275 + $0x110] sm:$0xff]
        %v349 = vld [vmem:[%s275 + $0x118] sm:$0xff]
        %v350 = vld [vmem:[%s275 + $0x120] sm:$0xff]
        %v351 = vld [vmem:[%s275 + $0x128] sm:$0xff]
        %v352 = vld [vmem:[%s275 + $0x130] sm:$0xff]
        %v353 = vld [vmem:[%s275 + $0x138] sm:$0xff]
        %v354 = vld [vmem:[%s275 + $0x140] sm:$0x33]
        %v355 = vld [vmem:[%s3] sm:$0xff]
        %v356 = vld [vmem:[%s3 + $0x8] sm:$0xff]
        %v357 = vld [vmem:[%s3 + $0x10] sm:$0xff]
        %v358 = vld [vmem:[%s3 + $0x18] sm:$0xff]
        %v359 = vld [vmem:[%s3 + $0x20] sm:$0xff]
        %v360 = vld [vmem:[%s3 + $0x28] sm:$0xff]
        %v361 = vld [vmem:[%s3 + $0x30] sm:$0xff]
        %v362 = vld [vmem:[%s3 + $0x38] sm:$0xff]
        %v363 = vld [vmem:[%s3 + $0x40] sm:$0xff]
        %v364 = vld [vmem:[%s3 + $0x48] sm:$0xff]
        %v365 = vld [vmem:[%s3 + $0x50] sm:$0xff]
        %v366 = vld [vmem:[%s3 + $0x58] sm:$0xff]
        %v367 = vld [vmem:[%s3 + $0x60] sm:$0xff]
        %v368 = vld [vmem:[%s3 + $0x68] sm:$0xff]
        %v369 = vld [vmem:[%s3 + $0x70] sm:$0xff]
        %v370 = vld [vmem:[%s3 + $0x78] sm:$0xff]
        %372 = vset.pattern.permute.xlu0 0
        %373 = vperm.xlu0 %372, %v355
        %v374 = vpop.permute.xlu0 %373
        %377 = vset.pattern.permute.xlu0 0
        %378 = vperm.xlu0 %377, %v356
        %v379 = vpop.permute.xlu0 %378
        %382 = vset.pattern.permute.xlu0 0
        %383 = vperm.xlu0 %382, %v357
        %v384 = vpop.permute.xlu0 %383
        %387 = vset.pattern.permute.xlu0 0
        %388 = vperm.xlu0 %387, %v358
        %v389 = vpop.permute.xlu0 %388
        %392 = vset.pattern.permute.xlu0 0
        %393 = vperm.xlu0 %392, %v359
        %v394 = vpop.permute.xlu0 %393
        %397 = vset.pattern.permute.xlu0 0
        %398 = vperm.xlu0 %397, %v360
        %v399 = vpop.permute.xlu0 %398
        %402 = vset.pattern.permute.xlu0 0
        %403 = vperm.xlu0 %402, %v361
        %v404 = vpop.permute.xlu0 %403
        %407 = vset.pattern.permute.xlu0 0
        %408 = vperm.xlu0 %407, %v362
        %v409 = vpop.permute.xlu0 %408
        %412 = vset.pattern.permute.xlu0 0
        %413 = vperm.xlu0 %412, %v363
        %v414 = vpop.permute.xlu0 %413
        %417 = vset.pattern.permute.xlu0 0
        %418 = vperm.xlu0 %417, %v364
        %v419 = vpop.permute.xlu0 %418
        %422 = vset.pattern.permute.xlu0 0
        %423 = vperm.xlu0 %422, %v365
        %v424 = vpop.permute.xlu0 %423
        %427 = vset.pattern.permute.xlu0 0
        %428 = vperm.xlu0 %427, %v366
        %v429 = vpop.permute.xlu0 %428
        %432 = vset.pattern.permute.xlu0 0
        %433 = vperm.xlu0 %432, %v367
        %v434 = vpop.permute.xlu0 %433
        %437 = vset.pattern.permute.xlu0 0
        %438 = vperm.xlu0 %437, %v368
        %v439 = vpop.permute.xlu0 %438
        %442 = vset.pattern.permute.xlu0 0
        %443 = vperm.xlu0 %442, %v369
        %v444 = vpop.permute.xlu0 %443
        %447 = vset.pattern.permute.xlu0 0
        %448 = vperm.xlu0 %447, %v370
        %v449 = vpop.permute.xlu0 %448
        %v483 = vunpack.c.l.b16 %v282
        %v484 = vunpack.c.h.b16 %v282
        %v485 = vunpack.c.l.b16 %v283
        %v486 = vunpack.c.l.b16 %v284
        %v487 = vunpack.c.h.b16 %v284
        %v488 = vunpack.c.l.b16 %v285
        %v489 = vunpack.c.l.b16 %v286
        %v490 = vunpack.c.h.b16 %v286
        %v491 = vunpack.c.l.b16 %v287
        %v492 = vunpack.c.l.b16 %v288
        %v493 = vunpack.c.h.b16 %v288
        %v494 = vunpack.c.l.b16 %v289
        %v495 = vunpack.c.l.b16 %v290
        %v496 = vunpack.c.h.b16 %v290
        %v497 = vunpack.c.l.b16 %v291
        %v498 = vunpack.c.l.b16 %v292
        %v499 = vunpack.c.h.b16 %v292
        %v500 = vunpack.c.l.b16 %v293
        %v501 = vunpack.c.l.b16 %v294
        %v502 = vunpack.c.h.b16 %v294
        %v503 = vunpack.c.l.b16 %v295
        %v504 = vunpack.c.l.b16 %v296
        %v505 = vunpack.c.h.b16 %v296
        %v506 = vunpack.c.l.b16 %v297
        %v507 = vunpack.c.l.b16 %v298
        %v508 = vunpack.c.h.b16 %v298
        %v509 = vunpack.c.l.b16 %v299
        %v510 = vunpack.c.l.b16 %v300
        %v511 = vunpack.c.h.b16 %v300
        %v512 = vunpack.c.l.b16 %v301
        %v513 = vunpack.c.l.b16 %v302
        %v514 = vunpack.c.h.b16 %v302
        %v515 = vunpack.c.l.b16 %v303
        %v516 = vunpack.c.l.b16 %v304
        %v517 = vunpack.c.h.b16 %v304
        %v518 = vunpack.c.l.b16 %v305
        %v519 = vunpack.c.l.b16 %v306
        %v520 = vunpack.c.h.b16 %v306
        %v521 = vunpack.c.l.b16 %v307
        %v522 = vunpack.c.l.b16 %v308
        %v523 = vunpack.c.h.b16 %v308
        %v524 = vunpack.c.l.b16 %v309
        %v525 = vunpack.c.l.b16 %v310
        %v526 = vunpack.c.h.b16 %v310
        %v527 = vunpack.c.l.b16 %v311
        %v528 = vunpack.c.l.b16 %v312
        %v529 = vunpack.c.h.b16 %v312
        %v530 = vunpack.c.l.b16 %v313
        %v531 = vpack.c.b16 %v486, %v483
        %v532 = vpack.c.b16 %v487, %v484
        %v533 = vpack.c.b16 %v488, %v485
        %v534 = vpack.c.b16 %v492, %v489
        %v535 = vpack.c.b16 %v493, %v490
        %v536 = vpack.c.b16 %v494, %v491
        %v537 = vpack.c.b16 %v498, %v495
        %v538 = vpack.c.b16 %v499, %v496
        %v539 = vpack.c.b16 %v500, %v497
        %v540 = vpack.c.b16 %v504, %v501
        %v541 = vpack.c.b16 %v505, %v502
        %v542 = vpack.c.b16 %v506, %v503
        %v543 = vpack.c.b16 %v510, %v507
        %v544 = vpack.c.b16 %v511, %v508
        %v545 = vpack.c.b16 %v512, %v509
        %v546 = vpack.c.b16 %v516, %v513
        %v547 = vpack.c.b16 %v517, %v514
        %v548 = vpack.c.b16 %v518, %v515
        %v549 = vpack.c.b16 %v522, %v519
        %v550 = vpack.c.b16 %v523, %v520
        %v551 = vpack.c.b16 %v524, %v521
        %v552 = vpack.c.b16 %v528, %v525
        %v553 = vpack.c.b16 %v529, %v526
        %v554 = vpack.c.b16 %v530, %v527
        %v612 = vunpack.c.l.b16 %v314
        %v613 = vunpack.c.h.b16 %v314
        %v614 = vunpack.c.l.b16 %v315
        %v615 = vunpack.c.h.b16 %v315
        %v616 = vunpack.c.l.b16 %v316
        %v617 = vunpack.c.h.b16 %v316
        %v618 = vunpack.c.l.b16 %v317
        %v619 = vunpack.c.h.b16 %v317
        %v620 = vunpack.c.l.b16 %v318
        %v621 = vunpack.c.h.b16 %v318
        %v622 = vunpack.c.l.b16 %v319
        %v623 = vunpack.c.h.b16 %v319
        %v624 = vunpack.c.l.b16 %v320
        %v625 = vunpack.c.h.b16 %v320
        %v626 = vunpack.c.l.b16 %v321
        %v627 = vunpack.c.h.b16 %v321
        %v628 = vunpack.c.l.b16 %v322
        %v629 = vunpack.c.h.b16 %v322
        %v630 = vunpack.c.l.b16 %v323
        %v631 = vunpack.c.h.b16 %v323
        %v632 = vunpack.c.l.b16 %v324
        %v633 = vunpack.c.h.b16 %v324
        %v634 = vunpack.c.l.b16 %v325
        %v635 = vunpack.c.h.b16 %v325
        %v636 = vunpack.c.l.b16 %v326
        %v637 = vunpack.c.h.b16 %v326
        %v638 = vunpack.c.l.b16 %v327
        %v639 = vunpack.c.h.b16 %v327
        %v640 = vunpack.c.l.b16 %v328
        %v641 = vunpack.c.h.b16 %v328
        %v642 = vunpack.c.l.b16 %v329
        %v643 = vunpack.c.h.b16 %v329
        %v644 = vunpack.c.l.b16 %v330
        %v645 = vunpack.c.h.b16 %v330
        %v646 = vunpack.c.l.b16 %v331
        %v647 = vunpack.c.h.b16 %v331
        %v648 = vunpack.c.l.b16 %v332
        %v649 = vunpack.c.h.b16 %v332
        %v650 = vunpack.c.l.b16 %v333
        %v651 = vunpack.c.h.b16 %v333
        %v652 = vunpack.c.l.b16 %v334
        %v653 = vunpack.c.h.b16 %v334
        %v654 = vunpack.c.l.b16 %v335
        %v655 = vunpack.c.h.b16 %v335
        %v656 = vunpack.c.l.b16 %v336
        %v657 = vunpack.c.h.b16 %v336
        %v658 = vunpack.c.l.b16 %v337
        %v659 = vunpack.c.h.b16 %v337
        %v660 = vunpack.c.l.b16 %v338
        %v661 = vunpack.c.h.b16 %v338
        %v662 = vunpack.c.l.b16 %v339
        %v663 = vunpack.c.h.b16 %v339
        %v664 = vunpack.c.l.b16 %v340
        %v665 = vunpack.c.h.b16 %v340
        %v666 = vunpack.c.l.b16 %v341
        %v667 = vunpack.c.h.b16 %v341
        %v668 = vunpack.c.l.b16 %v342
        %v669 = vunpack.c.h.b16 %v342
        %v670 = vunpack.c.l.b16 %v343
        %v671 = vunpack.c.h.b16 %v343
        %v672 = vunpack.c.l.b16 %v344
        %v673 = vunpack.c.h.b16 %v344
        %v674 = vunpack.c.l.b16 %v345
        %v675 = vunpack.c.h.b16 %v345
        %v676 = vunpack.c.l.b16 %v346
        %v677 = vunpack.c.h.b16 %v346
        %v678 = vunpack.c.l.b16 %v347
        %v679 = vunpack.c.h.b16 %v347
        %v680 = vunpack.c.l.b16 %v348
        %v681 = vunpack.c.h.b16 %v348
        %v682 = vunpack.c.l.b16 %v349
        %v683 = vunpack.c.h.b16 %v349
        %v684 = vunpack.c.l.b16 %v350
        %v685 = vunpack.c.h.b16 %v350
        %v686 = vunpack.c.l.b16 %v351
        %v687 = vunpack.c.h.b16 %v351
        %v688 = vunpack.c.l.b16 %v352
        %v689 = vunpack.c.h.b16 %v352
        %v690 = vunpack.c.l.b16 %v353
        %v691 = vunpack.c.h.b16 %v353
        %v692 = vunpack.c.l.b16 %v354
        %v693 = vunpack.c.h.b16 %v354
        %v694 = vpack.c.b16 %v614, %v612
        %v695 = vpack.c.b16 %v615, %v613
        %v696 = vpack.c.b16 %v618, %v616
        %v697 = vpack.c.b16 %v619, %v617
        %v698 = vpack.c.b16 %v622, %v620
        %v699 = vpack.c.b16 %v623, %v621
        %v700 = vpack.c.b16 %v626, %v624
        %v701 = vpack.c.b16 %v627, %v625
        %v702 = vpack.c.b16 %v630, %v628
        %v703 = vpack.c.b16 %v631, %v629
        %v704 = vpack.c.b16 %v634, %v632
        %v705 = vpack.c.b16 %v635, %v633
        %v706 = vpack.c.b16 %v638, %v636
        %v707 = vpack.c.b16 %v639, %v637
        %v708 = vpack.c.b16 %v642, %v640
        %v709 = vpack.c.b16 %v643, %v641
        %v710 = vpack.c.b16 %v646, %v644
        %v711 = vpack.c.b16 %v647, %v645
        %v712 = vpack.c.b16 %v650, %v648
        %v713 = vpack.c.b16 %v651, %v649
        %v714 = vpack.c.b16 %v654, %v652
        %v715 = vpack.c.b16 %v655, %v653
        %v716 = vpack.c.b16 %v658, %v656
        %v717 = vpack.c.b16 %v659, %v657
        %v718 = vpack.c.b16 %v662, %v660
        %v719 = vpack.c.b16 %v663, %v661
        %v720 = vpack.c.b16 %v666, %v664
        %v721 = vpack.c.b16 %v667, %v665
        %v722 = vpack.c.b16 %v670, %v668
        %v723 = vpack.c.b16 %v671, %v669
        %v724 = vpack.c.b16 %v674, %v672
        %v725 = vpack.c.b16 %v675, %v673
        %v726 = vpack.c.b16 %v678, %v676
        %v727 = vpack.c.b16 %v679, %v677
        %v728 = vpack.c.b16 %v682, %v680
        %v729 = vpack.c.b16 %v683, %v681
        %v730 = vpack.c.b16 %v686, %v684
        %v731 = vpack.c.b16 %v687, %v685
        %v732 = vpack.c.b16 %v690, %v688
        %v733 = vpack.c.b16 %v691, %v689
        %v734 = vpack.c.b16 %v692, %v692
        %v735 = vpack.c.b16 %v693, %v693
        %vm776 = vcmask 556032
        %v778 = vsel %vm776, %v533, 0
        %v781 = vsel %vm776, %v536, 0
        %v784 = vsel %vm776, %v539, 0
        %v787 = vsel %vm776, %v542, 0
        %v790 = vsel %vm776, %v545, 0
        %v793 = vsel %vm776, %v548, 0
        %v796 = vsel %vm776, %v551, 0
        %v799 = vsel %vm776, %v554, 0
        %vm801 = vcmask 1041408
        %v803 = vsel %vm801, %v734, 0
        %v806 = vsel %vm801, %v735, 0
        %808 = vmatprep.subr.bf16.mxu0 %v709
        %809 = vmatpush1.bf16.msra.mxu0 %v708
        %810 = vmatprep.subr.bf16.mxu0 %v707
        %811 = vmatpush1.bf16.msra.mxu0 %v706
        %812 = vmatprep.subr.bf16.mxu0 %v705
        %813 = vmatpush1.bf16.msra.mxu0 %v704
        %814 = vmatprep.subr.bf16.mxu0 %v703
        %815 = vmatpush1.bf16.msra.mxu0 %v702
        %816 = vmatprep.subr.bf16.mxu0 %v701
        %817 = vmatpush1.bf16.msra.mxu0 %v700
        %818 = vmatprep.subr.bf16.mxu0 %v699
        %819 = vmatpush1.bf16.msra.mxu0 %v698
        %820 = vmatprep.subr.bf16.mxu0 %v697
        %821 = vmatpush1.bf16.msra.mxu0 %v696
        %822 = vmatprep.subr.bf16.mxu0 %v695
        %823 = vmatpush1.bf16.msra.mxu0 %v694
        %824 = vmatprep.subr.bf16.mxu0 %v725
        %825 = vmatpush2.bf16.msra.mxu0 %v724
        %826 = vmatprep.subr.bf16.mxu0 %v723
        %827 = vmatpush2.bf16.msra.mxu0 %v722
        %828 = vmatprep.subr.bf16.mxu0 %v721
        %829 = vmatpush2.bf16.msra.mxu0 %v720
        %830 = vmatprep.subr.bf16.mxu0 %v719
        %831 = vmatpush2.bf16.msra.mxu0 %v718
        %832 = vmatprep.subr.bf16.mxu0 %v717
        %833 = vmatpush2.bf16.msra.mxu0 %v716
        %834 = vmatprep.subr.bf16.mxu0 %v715
        %835 = vmatpush2.bf16.msra.mxu0 %v714
        %836 = vmatprep.subr.bf16.mxu0 %v713
        %837 = vmatpush2.bf16.msra.mxu0 %v712
        %838 = vmatprep.subr.bf16.mxu0 %v711
        %839 = vmatpush2.bf16.msra.mxu0 %v710
        %840 = vmatprep.mubr.bf16.mxu0 %v532
        %841 = vmatmul.mubr.bf16.gmra.mxu0 %v531
        %v842 = vpop.f32.mrf.mxu0
        %v843 = vadd.f32 %v374, %v842
        %v844 = vpop.f32.mrf.mxu0
        %v845 = vadd.f32 %v374, %v844
        %v846 = vpop.f32.mrf.mxu0
        %v847 = vadd.f32 %v379, %v846
        %v848 = vpop.f32.mrf.mxu0
        %v849 = vadd.f32 %v379, %v848
        %850 = vmatprep.mubr.bf16.mxu0 %v535
        %851 = vmatmul.mubr.bf16.gmra.mxu0 %v534
        %v852 = vpop.f32.mrf.mxu0
        %v853 = vadd.f32 %v384, %v852
        %v854 = vpop.f32.mrf.mxu0
        %v855 = vadd.f32 %v384, %v854
        %v856 = vpop.f32.mrf.mxu0
        %v857 = vadd.f32 %v389, %v856
        %v858 = vpop.f32.mrf.mxu0
        %v859 = vadd.f32 %v389, %v858
        %860 = vmatprep.mubr.bf16.mxu0 %v538
        %861 = vmatmul.mubr.bf16.gmra.mxu0 %v537
        %v862 = vpop.f32.mrf.mxu0
        %v863 = vadd.f32 %v394, %v862
        %v864 = vpop.f32.mrf.mxu0
        %v865 = vadd.f32 %v394, %v864
        %v866 = vpop.f32.mrf.mxu0
        %v867 = vadd.f32 %v399, %v866
        %v868 = vpop.f32.mrf.mxu0
        %v869 = vadd.f32 %v399, %v868
        %870 = vmatprep.mubr.bf16.mxu0 %v541
        %871 = vmatmul.mubr.bf16.gmra.mxu0 %v540
        %v872 = vpop.f32.mrf.mxu0
        %v873 = vadd.f32 %v404, %v872
        %v874 = vpop.f32.mrf.mxu0
        %v875 = vadd.f32 %v404, %v874
        %v876 = vpop.f32.mrf.mxu0
        %v877 = vadd.f32 %v409, %v876
        %v878 = vpop.f32.mrf.mxu0
        %v879 = vadd.f32 %v409, %v878
        %880 = vmatprep.mubr.bf16.mxu0 %v544
        %881 = vmatmul.mubr.bf16.gmra.mxu0 %v543
        %v882 = vpop.f32.mrf.mxu0
        %v883 = vadd.f32 %v414, %v882
        %v884 = vpop.f32.mrf.mxu0
        %v885 = vadd.f32 %v414, %v884
        %v886 = vpop.f32.mrf.mxu0
        %v887 = vadd.f32 %v419, %v886
        %v888 = vpop.f32.mrf.mxu0
        %v889 = vadd.f32 %v419, %v888
        %890 = vmatprep.mubr.bf16.mxu0 %v547
        %891 = vmatmul.mubr.bf16.gmra.mxu0 %v546
        %v892 = vpop.f32.mrf.mxu0
        %v893 = vadd.f32 %v424, %v892
        %v894 = vpop.f32.mrf.mxu0
        %v895 = vadd.f32 %v424, %v894
        %v896 = vpop.f32.mrf.mxu0
        %v897 = vadd.f32 %v429, %v896
        %v898 = vpop.f32.mrf.mxu0
        %v899 = vadd.f32 %v429, %v898
        %900 = vmatprep.mubr.bf16.mxu0 %v550
        %901 = vmatmul.mubr.bf16.gmra.mxu0 %v549
        %v902 = vpop.f32.mrf.mxu0
        %v903 = vadd.f32 %v434, %v902
        %v904 = vpop.f32.mrf.mxu0
        %v905 = vadd.f32 %v434, %v904
        %v906 = vpop.f32.mrf.mxu0
        %v907 = vadd.f32 %v439, %v906
        %v908 = vpop.f32.mrf.mxu0
        %v909 = vadd.f32 %v439, %v908
        %910 = vmatprep.mubr.bf16.mxu0 %v553
        %911 = vmatmul.mubr.bf16.gmra.mxu0 %v552
        %v912 = vpop.f32.mrf.mxu0
        %v913 = vadd.f32 %v444, %v912
        %v914 = vpop.f32.mrf.mxu0
        %v915 = vadd.f32 %v444, %v914
        %v916 = vpop.f32.mrf.mxu0
        %v917 = vadd.f32 %v449, %v916
        %v918 = vpop.f32.mrf.mxu0
        %v919 = vadd.f32 %v449, %v918
        %920 = vdwg.mxu0
        %921 = vmatprep.subr.bf16.mxu0 0
        %922 = vmatpush1.bf16.msra.mxu0 0
        %923 = vmatprep.subr.bf16.mxu0 0
        %924 = vmatpush1.bf16.msra.mxu0 0
        %925 = vmatprep.subr.bf16.mxu0 0
        %926 = vmatpush1.bf16.msra.mxu0 0
        %927 = vmatprep.subr.bf16.mxu0 %v806
        %928 = vmatpush1.bf16.msra.mxu0 %v803
        %929 = vmatprep.subr.bf16.mxu0 %v733
        %930 = vmatpush1.bf16.msra.mxu0 %v732
        %931 = vmatprep.subr.bf16.mxu0 %v731
        %932 = vmatpush1.bf16.msra.mxu0 %v730
        %933 = vmatprep.subr.bf16.mxu0 %v729
        %934 = vmatpush1.bf16.msra.mxu0 %v728
        %935 = vmatprep.subr.bf16.mxu0 %v727
        %936 = vmatpush1.bf16.msra.mxu0 %v726
        %937 = vmatprep.subr.bf16.mxu0 0
        %938 = vmatpush2.bf16.msra.mxu0 0
        %939 = vmatprep.subr.bf16.mxu0 0
        %940 = vmatpush2.bf16.msra.mxu0 0
        %941 = vmatprep.subr.bf16.mxu0 0
        %942 = vmatpush2.bf16.msra.mxu0 0
        %943 = vmatprep.subr.bf16.mxu0 0
        %944 = vmatpush2.bf16.msra.mxu0 0
        %945 = vmatprep.subr.bf16.mxu0 0
        %946 = vmatpush2.bf16.msra.mxu0 0
        %947 = vmatprep.subr.bf16.mxu0 0
        %948 = vmatpush2.bf16.msra.mxu0 0
        %949 = vmatprep.subr.bf16.mxu0 0
        %950 = vmatpush2.bf16.msra.mxu0 0
        %951 = vmatprep.subr.bf16.mxu0 0
        %952 = vmatpush2.bf16.msra.mxu0 0
        %953 = vmatprep.mubr.bf16.mxu0 0
        %954 = vmatmul.mubr.bf16.gmra.mxu0 %v778
        %v955 = vpop.f32.mrf.mxu0
        %v956 = vadd.f32 %v843, %v955
        %v957 = vpop.f32.mrf.mxu0
        %v958 = vadd.f32 %v845, %v957
        %v959 = vpop.f32.mrf.mxu0
        %v960 = vadd.f32 %v847, %v959
        %v961 = vpop.f32.mrf.mxu0
        %v962 = vadd.f32 %v849, %v961
        %963 = vmatprep.mubr.bf16.mxu0 0
        %964 = vmatmul.mubr.bf16.gmra.mxu0 %v781
        %v965 = vpop.f32.mrf.mxu0
        %v966 = vadd.f32 %v853, %v965
        %v967 = vpop.f32.mrf.mxu0
        %v968 = vadd.f32 %v855, %v967
        %v969 = vpop.f32.mrf.mxu0
        %v970 = vadd.f32 %v857, %v969
        %v971 = vpop.f32.mrf.mxu0
        %v972 = vadd.f32 %v859, %v971
        %973 = vmatprep.mubr.bf16.mxu0 0
        %974 = vmatmul.mubr.bf16.gmra.mxu0 %v784
        %v975 = vpop.f32.mrf.mxu0
        %v976 = vadd.f32 %v863, %v975
        %v977 = vpop.f32.mrf.mxu0
        %v978 = vadd.f32 %v865, %v977
        %v979 = vpop.f32.mrf.mxu0
        %v980 = vadd.f32 %v867, %v979
        %v981 = vpop.f32.mrf.mxu0
        %v982 = vadd.f32 %v869, %v981
        %983 = vmatprep.mubr.bf16.mxu0 0
        %984 = vmatmul.mubr.bf16.gmra.mxu0 %v787
        %v985 = vpop.f32.mrf.mxu0
        %v986 = vadd.f32 %v873, %v985
        %v987 = vpop.f32.mrf.mxu0
        %v988 = vadd.f32 %v875, %v987
        %v989 = vpop.f32.mrf.mxu0
        %v990 = vadd.f32 %v877, %v989
        %v991 = vpop.f32.mrf.mxu0
        %v992 = vadd.f32 %v879, %v991
        %993 = vmatprep.mubr.bf16.mxu0 0
        %994 = vmatmul.mubr.bf16.gmra.mxu0 %v790
        %v995 = vpop.f32.mrf.mxu0
        %v996 = vadd.f32 %v883, %v995
        %v997 = vpop.f32.mrf.mxu0
        %v998 = vadd.f32 %v885, %v997
        %v999 = vpop.f32.mrf.mxu0
        %v1000 = vadd.f32 %v887, %v999
        %v1001 = vpop.f32.mrf.mxu0
        %v1002 = vadd.f32 %v889, %v1001
        %1003 = vmatprep.mubr.bf16.mxu0 0
        %1004 = vmatmul.mubr.bf16.gmra.mxu0 %v793
        %v1005 = vpop.f32.mrf.mxu0
        %v1006 = vadd.f32 %v893, %v1005
        %v1007 = vpop.f32.mrf.mxu0
        %v1008 = vadd.f32 %v895, %v1007
        %v1009 = vpop.f32.mrf.mxu0
        %v1010 = vadd.f32 %v897, %v1009
        %v1011 = vpop.f32.mrf.mxu0
        %v1012 = vadd.f32 %v899, %v1011
        %1013 = vmatprep.mubr.bf16.mxu0 0
        %1014 = vmatmul.mubr.bf16.gmra.mxu0 %v796
        %v1015 = vpop.f32.mrf.mxu0
        %v1016 = vadd.f32 %v903, %v1015
        %v1017 = vpop.f32.mrf.mxu0
        %v1018 = vadd.f32 %v905, %v1017
        %v1019 = vpop.f32.mrf.mxu0
        %v1020 = vadd.f32 %v907, %v1019
        %v1021 = vpop.f32.mrf.mxu0
        %v1022 = vadd.f32 %v909, %v1021
        %1023 = vmatprep.mubr.bf16.mxu0 0
        %1024 = vmatmul.mubr.bf16.gmra.mxu0 %v799
        %v1025 = vpop.f32.mrf.mxu0
        %v1026 = vadd.f32 %v913, %v1025
        %v1027 = vpop.f32.mrf.mxu0
        %v1028 = vadd.f32 %v915, %v1027
        %v1029 = vpop.f32.mrf.mxu0
        %v1030 = vadd.f32 %v917, %v1029
        %v1031 = vpop.f32.mrf.mxu0
        %v1032 = vadd.f32 %v919, %v1031
        %1033 = vdwg.mxu0
        %v1034 = vld [vmem:[%s280] sm:$0xff]
        %v1035 = vld [vmem:[%s280 + $0x8] sm:$0xff]
        %v1036 = vld [vmem:[%s280 + $0x10] sm:$0xff]
        %v1037 = vld [vmem:[%s280 + $0x18] sm:$0xff]
        %v1038 = vld [vmem:[%s280 + $0x20] sm:$0xff]
        %v1039 = vld [vmem:[%s280 + $0x28] sm:$0xff]
        %v1040 = vld [vmem:[%s280 + $0x30] sm:$0xff]
        %v1041 = vld [vmem:[%s280 + $0x38] sm:$0xff]
        %v1042 = vld [vmem:[%s4] sm:$0xff]
        %v1043 = vld [vmem:[%s4 + $0x8] sm:$0xff]
        %v1044 = vld [vmem:[%s4 + $0x10] sm:$0xff]
        %v1045 = vld [vmem:[%s4 + $0x18] sm:$0xff]
        %v1046 = vld [vmem:[%s4 + $0x20] sm:$0xff]
        %v1047 = vld [vmem:[%s4 + $0x28] sm:$0xff]
        %v1048 = vld [vmem:[%s4 + $0x30] sm:$0xff]
        %v1049 = vld [vmem:[%s4 + $0x38] sm:$0xff]
        %s1050 = scalar_lea.vmem %s4, 64
        %v1051 = vld [vmem:[%s1050] sm:$0xff]
        %v1052 = vld [vmem:[%s1050 + $0x8] sm:$0xff]
        %v1053 = vld [vmem:[%s1050 + $0x10] sm:$0xff]
        %v1054 = vld [vmem:[%s1050 + $0x18] sm:$0xff]
        %v1055 = vld [vmem:[%s1050 + $0x20] sm:$0xff]
        %v1056 = vld [vmem:[%s1050 + $0x28] sm:$0xff]
        %v1057 = vld [vmem:[%s1050 + $0x30] sm:$0xff]
        %v1058 = vld [vmem:[%s1050 + $0x38] sm:$0xff]
        %s1059 = scalar_lea.vmem %s4, 128
        %v1060 = vld [vmem:[%s1059] sm:$0xff]
        %v1061 = vld [vmem:[%s1059 + $0x8] sm:$0xff]
        %v1062 = vld [vmem:[%s1059 + $0x10] sm:$0xff]
        %v1063 = vld [vmem:[%s1059 + $0x18] sm:$0xff]
        %v1064 = vld [vmem:[%s1059 + $0x20] sm:$0xff]
        %v1065 = vld [vmem:[%s1059 + $0x28] sm:$0xff]
        %v1066 = vld [vmem:[%s1059 + $0x30] sm:$0xff]
        %v1067 = vld [vmem:[%s1059 + $0x38] sm:$0xff]
        %v1068 = vmul.f32 %v1034, %v1042
        %v1069 = vmul.f32 %v1035, %v1043
        %v1070 = vmul.f32 %v1036, %v1044
        %v1071 = vmul.f32 %v1037, %v1045
        %v1072 = vmul.f32 %v1038, %v1046
        %v1073 = vmul.f32 %v1039, %v1047
        %v1074 = vmul.f32 %v1040, %v1048
        %v1075 = vmul.f32 %v1041, %v1049
        %v1076 = vadd.f32 %v956, %v1068
        %v1077 = vadd.f32 %v958, %v1069
        %v1078 = vadd.f32 %v960, %v1070
        %v1079 = vadd.f32 %v962, %v1071
        %v1080 = vadd.f32 %v966, %v1072
        %v1081 = vadd.f32 %v968, %v1073
        %v1082 = vadd.f32 %v970, %v1074
        %v1083 = vadd.f32 %v972, %v1075
        %v1084 = vxor.u32 %v1076, 2147483648
        %v1085 = vxor.u32 %v1077, 2147483648
        %v1086 = vxor.u32 %v1078, 2147483648
        %v1087 = vxor.u32 %v1079, 2147483648
        %v1088 = vxor.u32 %v1080, 2147483648
        %v1089 = vxor.u32 %v1081, 2147483648
        %v1090 = vxor.u32 %v1082, 2147483648
        %v1091 = vxor.u32 %v1083, 2147483648
        %v1092 = vmul.f32 %v1084, 1.442695
        %v1093 = vpow.pop %v1092
        %v1094 = vmul.f32 %v1085, 1.442695
        %v1095 = vpow.pop %v1094
        %v1096 = vmul.f32 %v1086, 1.442695
        %v1097 = vpow.pop %v1096
        %v1098 = vmul.f32 %v1087, 1.442695
        %v1099 = vpow.pop %v1098
        %v1100 = vmul.f32 %v1088, 1.442695
        %v1101 = vpow.pop %v1100
        %v1102 = vmul.f32 %v1089, 1.442695
        %v1103 = vpow.pop %v1102
        %v1104 = vmul.f32 %v1090, 1.442695
        %v1105 = vpow.pop %v1104
        %v1106 = vmul.f32 %v1091, 1.442695
        %v1107 = vpow.pop %v1106
        %v1108 = vadd.f32 %v1093, 1.0
        %v1109 = vadd.f32 %v1095, 1.0
        %v1110 = vadd.f32 %v1097, 1.0
        %v1111 = vadd.f32 %v1099, 1.0
        %v1112 = vadd.f32 %v1101, 1.0
        %v1113 = vadd.f32 %v1103, 1.0
        %v1114 = vadd.f32 %v1105, 1.0
        %v1115 = vadd.f32 %v1107, 1.0
        %v1116 = vrcp.pop %v1108
        %v1117 = vmul.f32 1.0, %v1116
        %v1118 = vrcp.pop %v1109
        %v1119 = vmul.f32 1.0, %v1118
        %v1120 = vrcp.pop %v1110
        %v1121 = vmul.f32 1.0, %v1120
        %v1122 = vrcp.pop %v1111
        %v1123 = vmul.f32 1.0, %v1122
        %v1124 = vrcp.pop %v1112
        %v1125 = vmul.f32 1.0, %v1124
        %v1126 = vrcp.pop %v1113
        %v1127 = vmul.f32 1.0, %v1126
        %v1128 = vrcp.pop %v1114
        %v1129 = vmul.f32 1.0, %v1128
        %v1130 = vrcp.pop %v1115
        %v1131 = vmul.f32 1.0, %v1130
        %v1132 = vmul.f32 %v1034, %v1051
        %v1133 = vmul.f32 %v1035, %v1052
        %v1134 = vmul.f32 %v1036, %v1053
        %v1135 = vmul.f32 %v1037, %v1054
        %v1136 = vmul.f32 %v1038, %v1055
        %v1137 = vmul.f32 %v1039, %v1056
        %v1138 = vmul.f32 %v1040, %v1057
        %v1139 = vmul.f32 %v1041, %v1058
        %v1140 = vadd.f32 %v976, %v1132
        %v1141 = vadd.f32 %v978, %v1133
        %v1142 = vadd.f32 %v980, %v1134
        %v1143 = vadd.f32 %v982, %v1135
        %v1144 = vadd.f32 %v986, %v1136
        %v1145 = vadd.f32 %v988, %v1137
        %v1146 = vadd.f32 %v990, %v1138
        %v1147 = vadd.f32 %v992, %v1139
        %v1148 = vxor.u32 %v1140, 2147483648
        %v1149 = vxor.u32 %v1141, 2147483648
        %v1150 = vxor.u32 %v1142, 2147483648
        %v1151 = vxor.u32 %v1143, 2147483648
        %v1152 = vxor.u32 %v1144, 2147483648
        %v1153 = vxor.u32 %v1145, 2147483648
        %v1154 = vxor.u32 %v1146, 2147483648
        %v1155 = vxor.u32 %v1147, 2147483648
        %v1156 = vmul.f32 %v1148, 1.442695
        %v1157 = vpow.pop %v1156
        %v1158 = vmul.f32 %v1149, 1.442695
        %v1159 = vpow.pop %v1158
        %v1160 = vmul.f32 %v1150, 1.442695
        %v1161 = vpow.pop %v1160
        %v1162 = vmul.f32 %v1151, 1.442695
        %v1163 = vpow.pop %v1162
        %v1164 = vmul.f32 %v1152, 1.442695
        %v1165 = vpow.pop %v1164
        %v1166 = vmul.f32 %v1153, 1.442695
        %v1167 = vpow.pop %v1166
        %v1168 = vmul.f32 %v1154, 1.442695
        %v1169 = vpow.pop %v1168
        %v1170 = vmul.f32 %v1155, 1.442695
        %v1171 = vpow.pop %v1170
        %v1172 = vadd.f32 %v1157, 1.0
        %v1173 = vadd.f32 %v1159, 1.0
        %v1174 = vadd.f32 %v1161, 1.0
        %v1175 = vadd.f32 %v1163, 1.0
        %v1176 = vadd.f32 %v1165, 1.0
        %v1177 = vadd.f32 %v1167, 1.0
        %v1178 = vadd.f32 %v1169, 1.0
        %v1179 = vadd.f32 %v1171, 1.0
        %v1180 = vrcp.pop %v1172
        %v1181 = vmul.f32 1.0, %v1180
        %v1182 = vrcp.pop %v1173
        %v1183 = vmul.f32 1.0, %v1182
        %v1184 = vrcp.pop %v1174
        %v1185 = vmul.f32 1.0, %v1184
        %v1186 = vrcp.pop %v1175
        %v1187 = vmul.f32 1.0, %v1186
        %v1188 = vrcp.pop %v1176
        %v1189 = vmul.f32 1.0, %v1188
        %v1190 = vrcp.pop %v1177
        %v1191 = vmul.f32 1.0, %v1190
        %v1192 = vrcp.pop %v1178
        %v1193 = vmul.f32 1.0, %v1192
        %v1194 = vrcp.pop %v1179
        %v1195 = vmul.f32 1.0, %v1194
        %v1196 = vmul.f32 %v1181, %v1034
        %v1197 = vmul.f32 %v1183, %v1035
        %v1198 = vmul.f32 %v1185, %v1036
        %v1199 = vmul.f32 %v1187, %v1037
        %v1200 = vmul.f32 %v1189, %v1038
        %v1201 = vmul.f32 %v1191, %v1039
        %v1202 = vmul.f32 %v1193, %v1040
        %v1203 = vmul.f32 %v1195, %v1041
        %v1204 = vtanh.pop %v996
        %v1205 = vtanh.pop %v998
        %v1206 = vtanh.pop %v1000
        %v1207 = vtanh.pop %v1002
        %v1208 = vtanh.pop %v1006
        %v1209 = vtanh.pop %v1008
        %v1210 = vtanh.pop %v1010
        %v1211 = vtanh.pop %v1012
        %v1212 = vmul.f32 %v1117, %v1204
        %v1213 = vmul.f32 %v1119, %v1205
        %v1214 = vmul.f32 %v1121, %v1206
        %v1215 = vmul.f32 %v1123, %v1207
        %v1216 = vmul.f32 %v1125, %v1208
        %v1217 = vmul.f32 %v1127, %v1209
        %v1218 = vmul.f32 %v1129, %v1210
        %v1219 = vmul.f32 %v1131, %v1211
        %v1220 = vadd.f32 %v1196, %v1212
        %v1221 = vadd.f32 %v1197, %v1213
        %v1222 = vadd.f32 %v1198, %v1214
        %v1223 = vadd.f32 %v1199, %v1215
        %v1224 = vadd.f32 %v1200, %v1216
        %v1225 = vadd.f32 %v1201, %v1217
        %v1226 = vadd.f32 %v1202, %v1218
        %v1227 = vadd.f32 %v1203, %v1219
        %v1228 = vmul.f32 %v1220, %v1060
        %v1229 = vmul.f32 %v1221, %v1061
        %v1230 = vmul.f32 %v1222, %v1062
        %v1231 = vmul.f32 %v1223, %v1063
        %v1232 = vmul.f32 %v1224, %v1064
        %v1233 = vmul.f32 %v1225, %v1065
        %v1234 = vmul.f32 %v1226, %v1066
        %v1235 = vmul.f32 %v1227, %v1067
        %v1236 = vadd.f32 %v1016, %v1228
        %v1237 = vadd.f32 %v1018, %v1229
        %v1238 = vadd.f32 %v1020, %v1230
        %v1239 = vadd.f32 %v1022, %v1231
        %v1240 = vadd.f32 %v1026, %v1232
        %v1241 = vadd.f32 %v1028, %v1233
        %v1242 = vadd.f32 %v1030, %v1234
        %v1243 = vadd.f32 %v1032, %v1235
        %v1244 = vxor.u32 %v1236, 2147483648
        %v1245 = vxor.u32 %v1237, 2147483648
        %v1246 = vxor.u32 %v1238, 2147483648
        %v1247 = vxor.u32 %v1239, 2147483648
        %v1248 = vxor.u32 %v1240, 2147483648
        %v1249 = vxor.u32 %v1241, 2147483648
        %v1250 = vxor.u32 %v1242, 2147483648
        %v1251 = vxor.u32 %v1243, 2147483648
        %v1252 = vmul.f32 %v1244, 1.442695
        %v1253 = vpow.pop %v1252
        %v1254 = vmul.f32 %v1245, 1.442695
        %v1255 = vpow.pop %v1254
        %v1256 = vmul.f32 %v1246, 1.442695
        %v1257 = vpow.pop %v1256
        %v1258 = vmul.f32 %v1247, 1.442695
        %v1259 = vpow.pop %v1258
        %v1260 = vmul.f32 %v1248, 1.442695
        %v1261 = vpow.pop %v1260
        %v1262 = vmul.f32 %v1249, 1.442695
        %v1263 = vpow.pop %v1262
        %v1264 = vmul.f32 %v1250, 1.442695
        %v1265 = vpow.pop %v1264
        %v1266 = vmul.f32 %v1251, 1.442695
        %v1267 = vpow.pop %v1266
        %v1268 = vadd.f32 %v1253, 1.0
        %v1269 = vadd.f32 %v1255, 1.0
        %v1270 = vadd.f32 %v1257, 1.0
        %v1271 = vadd.f32 %v1259, 1.0
        %v1272 = vadd.f32 %v1261, 1.0
        %v1273 = vadd.f32 %v1263, 1.0
        %v1274 = vadd.f32 %v1265, 1.0
        %v1275 = vadd.f32 %v1267, 1.0
        %v1276 = vrcp.pop %v1268
        %v1277 = vmul.f32 1.0, %v1276
        %v1278 = vrcp.pop %v1269
        %v1279 = vmul.f32 1.0, %v1278
        %v1280 = vrcp.pop %v1270
        %v1281 = vmul.f32 1.0, %v1280
        %v1282 = vrcp.pop %v1271
        %v1283 = vmul.f32 1.0, %v1282
        %v1284 = vrcp.pop %v1272
        %v1285 = vmul.f32 1.0, %v1284
        %v1286 = vrcp.pop %v1273
        %v1287 = vmul.f32 1.0, %v1286
        %v1288 = vrcp.pop %v1274
        %v1289 = vmul.f32 1.0, %v1288
        %v1290 = vrcp.pop %v1275
        %v1291 = vmul.f32 1.0, %v1290
        %v1292 = vtanh.pop %v1220
        %v1293 = vtanh.pop %v1221
        %v1294 = vtanh.pop %v1222
        %v1295 = vtanh.pop %v1223
        %v1296 = vtanh.pop %v1224
        %v1297 = vtanh.pop %v1225
        %v1298 = vtanh.pop %v1226
        %v1299 = vtanh.pop %v1227
        %v1300 = vmul.f32 %v1277, %v1292
        %v1301 = vmul.f32 %v1279, %v1293
        %v1302 = vmul.f32 %v1281, %v1294
        %v1303 = vmul.f32 %v1283, %v1295
        %v1304 = vmul.f32 %v1285, %v1296
        %v1305 = vmul.f32 %v1287, %v1297
        %v1306 = vmul.f32 %v1289, %v1298
        %v1307 = vmul.f32 %v1291, %v1299
        %1308 = vst [vmem:[%s263] sm:$0xff] %v1300
        %1309 = vst [vmem:[%s263 + $0x8] sm:$0xff] %v1301
        %1310 = vst [vmem:[%s263 + $0x10] sm:$0xff] %v1302
        %1311 = vst [vmem:[%s263 + $0x18] sm:$0xff] %v1303
        %1312 = vst [vmem:[%s263 + $0x20] sm:$0xff] %v1304
        %1313 = vst [vmem:[%s263 + $0x28] sm:$0xff] %v1305
        %1314 = vst [vmem:[%s263 + $0x30] sm:$0xff] %v1306
        %1315 = vst [vmem:[%s263 + $0x38] sm:$0xff] %v1307
        %1316 = vst [vmem:[%s270] sm:$0xff] %v1220
        %1317 = vst [vmem:[%s270 + $0x8] sm:$0xff] %v1221
        %1318 = vst [vmem:[%s270 + $0x10] sm:$0xff] %v1222
        %1319 = vst [vmem:[%s270 + $0x18] sm:$0xff] %v1223
        %1320 = vst [vmem:[%s270 + $0x20] sm:$0xff] %v1224
        %1321 = vst [vmem:[%s270 + $0x28] sm:$0xff] %v1225
        %1322 = vst [vmem:[%s270 + $0x30] sm:$0xff] %v1226
        %1323 = vst [vmem:[%s270 + $0x38] sm:$0xff] %v1227
        %s1324 = sand.u32 %s147, 1
        %s1325 = scalar_lea.sflag [#allocation3], %s1324
        %s1326 = sand.u32 %s147, 1
        %s1327 = smul.addr %s1326, 64
        %s1328 = scalar_lea.vmem [#allocation2], %s1327
        %s1329 = sand.u32 %s173, 1
        %s1330 = scalar_lea.sflag [#allocation5], %s1329
        %s1331 = sand.u32 %s173, 1
        %s1332 = smul.addr %s1331, 64
        %s1333 = scalar_lea.vmem [#allocation4], %s1332
        // Predicated region
        $region41: #{tpu_custom_call.1} parent=39 // pred_check
          %p1334 = pneg %p157
        $region42: #{tpu_custom_call.1} parent=39 // pred_check_branch
          %1336 = sbr.rel (%p1334) target = $region44
        $region43: #{tpu_custom_call.1} parent=39 // pred_region
          %s1338 = ssub.s32 1024, 1024
          %1339 = vsyncadd %s1325, %s1338
          %s1340 = smul.addr %s24, 8
          %s1341 = smul.addr %s1340, 128
          %s1342 = scalar_lea.hbm %s5, %s1341
          %s1343 = sshll.u32 %s1328, 4
          %s1344 = int_to_ptr.vmem [resolvable:$true] %s1343
          %1349 = dma.vmem_to_hbm [thread:$0]  %s1344, 1024, %s1342, %s1325, 256, 256, 16
        $region44: #{tpu_custom_call.1} parent=39 // pred_fallthru
          _
        // Predicated region
        $region45: #{tpu_custom_call.1} parent=39 // pred_check
          %p1350 = pneg %p183
        $region46: #{tpu_custom_call.1} parent=39 // pred_check_branch
          %1352 = sbr.rel (%p1350) target = $region48
        $region47: #{tpu_custom_call.1} parent=39 // pred_region
          %s1354 = ssub.s32 1024, 1024
          %1355 = vsyncadd %s1330, %s1354
          %s1356 = smul.addr %s24, 8
          %s1357 = smul.addr %s1356, 128
          %s1358 = scalar_lea.hbm %s6, %s1357
          %s1359 = sshll.u32 %s1333, 4
          %s1360 = int_to_ptr.vmem [resolvable:$true] %s1359
          %1365 = dma.vmem_to_hbm [thread:$0]  %s1360, 1024, %s1358, %s1330, 256, 256, 16
        $region48: #{tpu_custom_call.1} parent=39 // pred_fallthru
          _
      $region40: #{tpu_custom_call.1} parent=5 // pred_fallthru
        _
      %p1366 = scmp.le.s32.totalorder 2, %s19
      // Predicated region
      $region49: #{tpu_custom_call.1} parent=5 // pred_check
        %p1367 = pneg %p1366
      $region50: #{tpu_custom_call.1} parent=5 // pred_check_branch
        %1369 = sbr.rel (%p1367) target = $region52
      $region51: #{tpu_custom_call.1} parent=5 // pred_region
        %s1370 = ssub.s32 %s19, 2
        // Predicated region
        $region53: #{tpu_custom_call.1} parent=51 // pred_check
          %p1371 = pneg %p163
        $region54: #{tpu_custom_call.1} parent=51 // pred_check_branch
          %1373 = sbr.rel (%p1371) target = $region56
        $region55: #{tpu_custom_call.1} parent=51 // pred_region
          %s1374 = sand.u32 %s148, 1
          %s1375 = scalar_lea.sflag [#allocation3], %s1374
          %s1376 = sand.u32 %s148, 1
          %s1377 = smul.addr %s1376, 64
          %s1378 = scalar_lea.vmem [#allocation2], %s1377
          %1379 = dma.done %s1375, 1024
        $region56: #{tpu_custom_call.1} parent=51 // pred_fallthru
          _
        // Predicated region
        $region57: #{tpu_custom_call.1} parent=51 // pred_check
          %p1380 = pneg %p189
        $region58: #{tpu_custom_call.1} parent=51 // pred_check_branch
          %1382 = sbr.rel (%p1380) target = $region60
        $region59: #{tpu_custom_call.1} parent=51 // pred_region
          %s1383 = sand.u32 %s174, 1
          %s1384 = scalar_lea.sflag [#allocation5], %s1383
          %s1385 = sand.u32 %s174, 1
          %s1386 = smul.addr %s1385, 64
          %s1387 = scalar_lea.vmem [#allocation4], %s1386
          %1388 = dma.done %s1384, 1024
        $region60: #{tpu_custom_call.1} parent=51 // pred_fallthru
          _
      $region52: #{tpu_custom_call.1} parent=5 // pred_fallthru
        _
    $region6: #{tpu_custom_call.1} parent=1 // loop_footer
      %s23 = sadd.s32 1, %s19
    $region7: #{tpu_custom_call.1} parent=1 // loop_footer_branch
      %18 = sbr.rel target = $region3
    $region8: #{tpu_custom_call.1} parent=1 // loop_exit
      _
    %1389 = vsyncpa [#allocation3], 1
    %s1390 = scalar_lea.sflag [#allocation3], 1
    %1391 = vsyncpa %s1390, 1
    %1392 = vsyncpa [#allocation5], 1
    %s1393 = scalar_lea.sflag [#allocation5], 1
    %1394 = vsyncpa %s1393, 1

</llo_original>
